<compile_context>
chip_gen: v7x
topology: tpu7x:2x2x1
jax: 0.10.0
libtpu: 0.0.40
codegen_flags: <defaults>
</compile_context>

<pallas_src>
import functools

import jax
import jax.numpy as jnp
from jax.experimental import pallas as pl
from jax.experimental.pallas import tpu as pltpu


def _round_up(n, m):
    return ((n + m - 1) // m) * m


def _mlp_kernel(x_ref, w1_ref, b1_ref, w2_ref, b2_ref, o_ref):
    # Cast x to bf16 on the fly (no wrapper-side bf16 copy of x in HBM).
    x = x_ref[...].astype(jnp.bfloat16)
    # Hidden layer: bf16 MXU operands, f32 accumulate, tanh in f32 (EUP).
    h = jnp.tanh(
        jnp.dot(x, w1_ref[...], preferred_element_type=jnp.float32) + b1_ref[...]
    )
    # Output layer: hidden activations cast to bf16 for the second MXU matmul.
    z = (
        jnp.dot(h.astype(jnp.bfloat16), w2_ref[...],
                preferred_element_type=jnp.float32)
        + b2_ref[...]
    )
    # sigmoid(z) == 0.5 * (tanh(0.5*z) + 1): single EUP op instead of exp + div.
    o_ref[...] = (0.5 * (jnp.tanh(0.5 * z) + 1.0)).astype(o_ref.dtype)


def prepare_params(w1, b1, w2, b2):
    """One-time param prep (run at init, NOT per forward call).

    Pads the output dim to a lane-dense multiple of 128, casts weights to
    bf16 (MXU operands) and biases to f32 (VPU adds). Returns the
    kernel-ready params and the true out_size for the final slice.
    """
    in_size, hidden = w1.shape
    out_size = w2.shape[1]
    out_pad = _round_up(max(out_size, 128), 128)

    w1_k = w1.astype(jnp.bfloat16)                              # (in, hidden)
    b1_k = jnp.reshape(b1, (1, hidden)).astype(jnp.float32)     # (1, hidden)
    w2_k = jnp.pad(w2, ((0, 0), (0, out_pad - out_size))).astype(jnp.bfloat16)
    b2_k = jnp.pad(jnp.reshape(b2, (1, out_size)),
                   ((0, 0), (0, out_pad - out_size))).astype(jnp.float32)
    return (w1_k, b1_k, w2_k, b2_k), out_size


@functools.partial(jax.jit, static_argnames=("out_size", "num_batch_blocks"))
def nnet_multiclass_forward(x, w1_k, b1_k, w2_k, b2_k, *, out_size,
                            num_batch_blocks=2):
    """Forward pass.

    x:     (B, in_size)        float32 (cast to bf16 inside the kernel)
    w1_k:  (in_size, hidden)   bfloat16   (from prepare_params)
    b1_k:  (1, hidden)         float32
    w2_k:  (hidden, out_pad)   bfloat16   (out dim pre-padded to 128k)
    b2_k:  (1, out_pad)        float32
    Returns (B, out_size) float32 sigmoid probabilities.

    num_batch_blocks: 2 (even) for dual-TC v7x so both TensorCores get a
    parallel block; 1 for single-TC v5e/v6e to avoid an extra grid step.
    """
    B, in_size = x.shape
    hidden = w1_k.shape[1]
    out_pad = w2_k.shape[1]

    # Batch tile: multiple of 16 (bf16 sublane packing), num_batch_blocks blocks.
    nb = max(1, num_batch_blocks)
    bb = _round_up(max(pl.cdiv(B, nb), 16), 16)
    B_pad = _round_up(B, bb)
    grid = (B_pad // bb,)

    # Only pad the batch if actually needed (avoid a no-op copy pass over x).
    x_p = x if B_pad == B else jnp.pad(x, ((0, B_pad - B), (0, 0)))

    cost = pl.CostEstimate(
        flops=2 * B_pad * (in_size * hidden + hidden * out_pad),
        transcendentals=B_pad * (hidden + out_pad),
        bytes_accessed=(
            B_pad * in_size * 4            # x (f32)
            + in_size * hidden * 2         # w1 (bf16)
            + hidden * out_pad * 2         # w2 (bf16)
            + (hidden + out_pad) * 4       # biases (f32)
            + B_pad * out_pad * 4          # output (f32)
        ),
    )

    out = pl.pallas_call(
        _mlp_kernel,
        out_shape=jax.ShapeDtypeStruct((B_pad, out_pad), jnp.float32),
        grid_spec=pl.GridSpec(
            grid=grid,
            in_specs=[
                # batch-tiled activations (f32; cast to bf16 in-kernel)
                pl.BlockSpec((bb, in_size), lambda i: (i, 0)),
                # weights / biases: full arrays, resident every grid step
                pl.BlockSpec((in_size, hidden), lambda i: (0, 0)),
                pl.BlockSpec((1, hidden), lambda i: (0, 0)),
                pl.BlockSpec((hidden, out_pad), lambda i: (0, 0)),
                pl.BlockSpec((1, out_pad), lambda i: (0, 0)),
            ],
            out_specs=pl.BlockSpec((bb, out_pad), lambda i: (i, 0)),
        ),
        compiler_params=pltpu.CompilerParams(
            dimension_semantics=("parallel",),
            vmem_limit_bytes=32 * 1024 * 1024,
        ),
        cost_estimate=cost,
    )(x_p, w1_k, b1_k, w2_k, b2_k)

    # Slice away batch + lane padding.
    return out[:B, :out_size]


def init_params(key, in_size, hidden_size, out_size):
    """Deterministic init matching torch nn.Linear shapes (then transposed)."""
    k1, k2, k3, k4 = jax.random.split(key, 4)
    # torch Linear weight shape is (out, in); build it, then transpose for x @ W.
    bound1 = 1.0 / jnp.sqrt(in_size)
    w1_t = jax.random.uniform(k1, (hidden_size, in_size), jnp.float32, -bound1, bound1)
    b1 = jax.random.uniform(k2, (hidden_size,), jnp.float32, -bound1, bound1)
    bound2 = 1.0 / jnp.sqrt(hidden_size)
    w2_t = jax.random.uniform(k3, (out_size, hidden_size), jnp.float32, -bound2, bound2)
    b2 = jax.random.uniform(k4, (out_size,), jnp.float32, -bound2, bound2)
    return (
        w1_t.T,                      # (in, hidden)
        b1.reshape(1, hidden_size),  # (1, hidden)
        w2_t.T,                      # (hidden, out)
        b2.reshape(1, out_size),     # (1, out)
    )


if __name__ == "__main__":
    in_size, hidden_size, out_size = 16, 32, 4
    batch = 256

    key = jax.random.PRNGKey(0)
    kx, kp = jax.random.split(key)
    x = jax.random.normal(kx, (batch, in_size), jnp.float32)
    # preprocessing from the script: standardize features over the batch dim
    # (torch .std() is unbiased -> ddof=1)
    x = (x - x.mean(axis=0)) / x.std(axis=0, ddof=1)

    w1, b1, w2, b2 = init_params(kp, in_size, hidden_size, out_size)
    # One-time pad/cast of params (kept out of the per-call forward path).
    (w1_k, b1_k, w2_k, b2_k), osz = prepare_params(w1, b1, w2, b2)

    # 2 even batch blocks -> both v7x TensorCores busy; on v5e/v6e the extra
    # grid step costs ~0.35 µs (use num_batch_blocks=1 there if desired).
    out = nnet_multiclass_forward(x, w1_k, b1_k, w2_k, b2_k,
                                  out_size=osz, num_batch_blocks=2)
    out = jax.block_until_ready(out)

    # pure-JAX f32 reference check (tolerance relaxed for bf16 MXU operands)
    ref = jax.nn.sigmoid(jnp.tanh(x @ w1 + b1) @ w2 + b2)
    assert out.shape == (batch, out_size)
    err = float(jnp.max(jnp.abs(out - ref)))
    assert err < 2e-2, err

    print("KERNEL_OK")
</pallas_src>

<mosaic_0001>
module attributes {stable_mosaic.version = 11 : i64} {
  func.func @_mlp_kernel(%arg0: i32, %arg1: memref<128x16xf32, #tpu.memory_space<vmem>>, %arg2: memref<16x32xbf16, #tpu.memory_space<vmem>>, %arg3: memref<1x32xf32, #tpu.memory_space<vmem>>, %arg4: memref<32x128xbf16, #tpu.memory_space<vmem>>, %arg5: memref<1x128xf32, #tpu.memory_space<vmem>>, %arg6: memref<128x128xf32, #tpu.memory_space<vmem>>) attributes {dimension_semantics = [#tpu.dimension_semantics<parallel>], iteration_bounds = array<i64: 2>, scalar_prefetch = 0 : i64, scratch_operands = 0 : i64, tpu.core_type = #tpu.core_type<tc>, window_params = [{transform_indices = @transform_0, window_bounds = array<i64: 128, 16>}, {pipeline_mode = #tpu.pipeline_mode<synchronous>, transform_indices = @transform_1, window_bounds = array<i64: 16, 32>}, {pipeline_mode = #tpu.pipeline_mode<synchronous>, transform_indices = @transform_2, window_bounds = array<i64: 1, 32>}, {pipeline_mode = #tpu.pipeline_mode<synchronous>, transform_indices = @transform_3, window_bounds = array<i64: 32, 128>}, {pipeline_mode = #tpu.pipeline_mode<synchronous>, transform_indices = @transform_4, window_bounds = array<i64: 1, 128>}, {transform_indices = @transform_5, window_bounds = array<i64: 128, 128>}]} {
    %c0 = arith.constant 0 : index
    %c0_0 = arith.constant 0 : index
    %0 = vector.load %arg1[%c0, %c0_0] : memref<128x16xf32, #tpu.memory_space<vmem>>, vector<128x16xf32>
    %1 = arith.truncf %0 : vector<128x16xf32> to vector<128x16xbf16>
    %c0_1 = arith.constant 0 : index
    %c0_2 = arith.constant 0 : index
    %2 = vector.load %arg2[%c0_1, %c0_2] : memref<16x32xbf16, #tpu.memory_space<vmem>>, vector<16x32xbf16>
    %cst = arith.constant dense<0.000000e+00> : vector<128x32xf32>
    %3 = tpu.matmul %1, %2, %cst {dimension_numbers = #tpu.dot_dimension_numbers<[1], [0], [0], [1], [0, 0, 1, 1], [], []>} : vector<128x16xbf16>, vector<16x32xbf16>, vector<128x32xf32> -> vector<128x32xf32>
    %c0_3 = arith.constant 0 : index
    %c0_4 = arith.constant 0 : index
    %4 = vector.load %arg3[%c0_3, %c0_4] : memref<1x32xf32, #tpu.memory_space<vmem>>, vector<1x32xf32>
    %5 = vector.broadcast %4 : vector<1x32xf32> to vector<128x32xf32>
    %6 = arith.addf %3, %5 : vector<128x32xf32>
    %7 = math.tanh %6 : vector<128x32xf32>
    %8 = arith.truncf %7 : vector<128x32xf32> to vector<128x32xbf16>
    %c0_5 = arith.constant 0 : index
    %c0_6 = arith.constant 0 : index
    %9 = vector.load %arg4[%c0_5, %c0_6] : memref<32x128xbf16, #tpu.memory_space<vmem>>, vector<32x128xbf16>
    %cst_7 = arith.constant dense<0.000000e+00> : vector<128x128xf32>
    %10 = tpu.matmul %8, %9, %cst_7 {dimension_numbers = #tpu.dot_dimension_numbers<[1], [0], [0], [1], [0, 0, 1, 1], [], []>} : vector<128x32xbf16>, vector<32x128xbf16>, vector<128x128xf32> -> vector<128x128xf32>
    %c0_8 = arith.constant 0 : index
    %c0_9 = arith.constant 0 : index
    %11 = vector.load %arg5[%c0_8, %c0_9] : memref<1x128xf32, #tpu.memory_space<vmem>>, vector<1x128xf32>
    %12 = vector.broadcast %11 : vector<1x128xf32> to vector<128x128xf32>
    %13 = arith.addf %10, %12 : vector<128x128xf32>
    %cst_10 = arith.constant 5.000000e-01 : f32
    %14 = vector.broadcast %cst_10 : f32 to vector<128x128xf32>
    %15 = arith.mulf %14, %13 : vector<128x128xf32>
    %16 = math.tanh %15 : vector<128x128xf32>
    %cst_11 = arith.constant 1.000000e+00 : f32
    %17 = vector.broadcast %cst_11 : f32 to vector<128x128xf32>
    %18 = arith.addf %16, %17 : vector<128x128xf32>
    %cst_12 = arith.constant 5.000000e-01 : f32
    %19 = vector.broadcast %cst_12 : f32 to vector<128x128xf32>
    %20 = arith.mulf %19, %18 : vector<128x128xf32>
    %c0_13 = arith.constant 0 : index
    %c0_14 = arith.constant 0 : index
    %21 = vector.load %arg6[%c0_13, %c0_14] : memref<128x128xf32, #tpu.memory_space<vmem>>, vector<128x128xf32>
    tpu.vector_store %arg6[%c0_13, %c0_14], %20 {strides = array<i32>} : memref<128x128xf32, #tpu.memory_space<vmem>>, vector<128x128xf32>,
    return
  }
  func.func @transform_0(%arg0: i32) -> (i32, i32) {
    %c0_i32 = arith.constant 0 : i32
    %c0_i32_0 = arith.constant 0 : i32
    return %arg0, %c0_i32 : i32, i32
  }
  func.func @transform_1(%arg0: i32) -> (i32, i32) {
    %c0_i32 = arith.constant 0 : i32
    %c0_i32_0 = arith.constant 0 : i32
    %c0_i32_1 = arith.constant 0 : i32
    return %c0_i32, %c0_i32_0 : i32, i32
  }
  func.func @transform_2(%arg0: i32) -> (i32, i32) {
    %c0_i32 = arith.constant 0 : i32
    %c0_i32_0 = arith.constant 0 : i32
    %c0_i32_1 = arith.constant 0 : i32
    return %c0_i32, %c0_i32_0 : i32, i32
  }
  func.func @transform_3(%arg0: i32) -> (i32, i32) {
    %c0_i32 = arith.constant 0 : i32
    %c0_i32_0 = arith.constant 0 : i32
    %c0_i32_1 = arith.constant 0 : i32
    return %c0_i32, %c0_i32_0 : i32, i32
  }
  func.func @transform_4(%arg0: i32) -> (i32, i32) {
    %c0_i32 = arith.constant 0 : i32
    %c0_i32_0 = arith.constant 0 : i32
    %c0_i32_1 = arith.constant 0 : i32
    return %c0_i32, %c0_i32_0 : i32, i32
  }
  func.func @transform_5(%arg0: i32) -> (i32, i32) {
    %c0_i32 = arith.constant 0 : i32
    %c0_i32_0 = arith.constant 0 : i32
    return %arg0, %c0_i32 : i32, i32
  }
}

</mosaic_0001>

<llo_original>
// kernel: nnet_multiclass_forward.1
$region0: #{nnet_multiclass_forward.1}
  #allocation0 [shape = 'u32[]', space=smem, size = 0x4, offset = 0x4, fixed_abs, tag = 'smem constant byte address 0x4 - core index']
  #allocation1 [shape = 'u32[144,128]{1,0:T(1,128)}', space=vmem, size = 0x12000, scoped, tag = 'internal scratch']
  %s0 = inlined_call_operand.vmem [shape: f32[256,16], index: 0, kind: input, shape index: {}]
  %s1 = inlined_call_operand.vmem [shape: bf16[16,32], index: 1, kind: input, shape index: {}]
  %s2 = inlined_call_operand.vmem [shape: f32[1,32], index: 2, kind: input, shape index: {}]
  %s3 = inlined_call_operand.vmem [shape: bf16[32,128], index: 3, kind: input, shape index: {}]
  %s4 = inlined_call_operand.vmem [shape: f32[1,128], index: 4, kind: input, shape index: {}]
  %s5 = inlined_call_operand.vmem [shape: f32[256,128], index: 5, kind: output, shape index: {}]
  %s6 = sld [smem:[#allocation0]]
  $region53: #{nnet_multiclass_forward.1} parent=0
    _
  %s8 = ssub.s32 1, %s6
  %s9 = scalar_select 0, %s8, %s6
  loop: start=0, step=1, limit=4
  $region2: #{nnet_multiclass_forward.1} parent=0 // loop_pre_header
    _
  $region3: #{nnet_multiclass_forward.1} parent=0 // loop_header
    %s11 = sphi 0, %s15
    %p12 = scmp.ge.s32.totalorder %s11, 4
    %s21 = sphi 0, %s23
    %s24 = sphi 0, %s21
    %s25 = sphi 0, %s24
    %s41 = sphi 0, %s25
    %s45 = sphi 0, %s45
    %s47 = sphi 0, %s45
    %s48 = sphi 0, %s47
    %s62 = sphi 0, %s48
    %s66 = sphi 0, %s66
    %s68 = sphi 0, %s66
    %s69 = sphi 0, %s68
    %s83 = sphi 0, %s69
    %s87 = sphi 0, %s87
    %s89 = sphi 0, %s87
    %s90 = sphi 0, %s89
    %s104 = sphi 0, %s90
    %s108 = sphi 0, %s108
    %s110 = sphi 0, %s108
    %s111 = sphi 0, %s110
    %s125 = sphi 0, %s111
    %s131 = sphi 0, %s133
    %s134 = sphi 0, %s131
    %s135 = sphi 0, %s134
    %s151 = sphi 0, %s135
  $region4: #{nnet_multiclass_forward.1} parent=0 // loop_header_branch
    %14 = sbr.rel (%p12) target = $region8
  $region5: #{nnet_multiclass_forward.1} parent=0 // loop_body
    %s16 = ssub.s32 %s11, 1
    %s17 = ssub.s32 %s11, 2
    %s18 = sadd.s32 %s11, 1
    %s19 = ssub.s32 %s11, %s18
    %p20 = scmp.eq.s32.totalorder %s19, 0
    %s22 = sadd.s32 %s21, 1
    %s23 = scalar_select %p20, %s21, %s22
    %p26 = pneg %p20
    %p27 = scmp.eq.s32.totalorder %s11, 1
    %p28 = por %p26, %p27
    %p29 = scmp.ne.s32.totalorder %s21, %s24
    %p30 = scmp.eq.s32.totalorder %s11, 0
    %p31 = por %p29, %p30
    %p32 = scmp.ne.s32.totalorder %s21, %s24
    %p33 = scmp.eq.s32.totalorder %s16, 1
    %p34 = por %p32, %p33
    %p35 = scmp.ne.s32.totalorder %s24, %s25
    %p36 = scmp.eq.s32.totalorder %s16, 0
    %p37 = por %p35, %p36
    %p38 = scmp.ne.s32.totalorder %s24, %s25
    %p39 = scmp.eq.s32.totalorder %s17, 1
    %p40 = por %p38, %p39
    %p42 = scmp.ne.s32.totalorder %s25, %s41
    %p43 = scmp.eq.s32.totalorder %s17, 0
    %p44 = por %p42, %p43
    %s46 = sadd.s32 %s45, 1
    %p49 = scmp.eq.s32.totalorder %s11, 1
    %p50 = scmp.ne.s32.totalorder %s45, %s47
    %p51 = scmp.eq.s32.totalorder %s11, 0
    %p52 = por %p50, %p51
    %p53 = scmp.ne.s32.totalorder %s45, %s47
    %p54 = scmp.eq.s32.totalorder %s16, 1
    %p55 = por %p53, %p54
    %p56 = scmp.ne.s32.totalorder %s47, %s48
    %p57 = scmp.eq.s32.totalorder %s16, 0
    %p58 = por %p56, %p57
    %p59 = scmp.ne.s32.totalorder %s47, %s48
    %p60 = scmp.eq.s32.totalorder %s17, 1
    %p61 = por %p59, %p60
    %p63 = scmp.ne.s32.totalorder %s48, %s62
    %p64 = scmp.eq.s32.totalorder %s17, 0
    %p65 = por %p63, %p64
    %s67 = sadd.s32 %s66, 1
    %p70 = scmp.eq.s32.totalorder %s11, 1
    %p71 = scmp.ne.s32.totalorder %s66, %s68
    %p72 = scmp.eq.s32.totalorder %s11, 0
    %p73 = por %p71, %p72
    %p74 = scmp.ne.s32.totalorder %s66, %s68
    %p75 = scmp.eq.s32.totalorder %s16, 1
    %p76 = por %p74, %p75
    %p77 = scmp.ne.s32.totalorder %s68, %s69
    %p78 = scmp.eq.s32.totalorder %s16, 0
    %p79 = por %p77, %p78
    %p80 = scmp.ne.s32.totalorder %s68, %s69
    %p81 = scmp.eq.s32.totalorder %s17, 1
    %p82 = por %p80, %p81
    %p84 = scmp.ne.s32.totalorder %s69, %s83
    %p85 = scmp.eq.s32.totalorder %s17, 0
    %p86 = por %p84, %p85
    %s88 = sadd.s32 %s87, 1
    %p91 = scmp.eq.s32.totalorder %s11, 1
    %p92 = scmp.ne.s32.totalorder %s87, %s89
    %p93 = scmp.eq.s32.totalorder %s11, 0
    %p94 = por %p92, %p93
    %p95 = scmp.ne.s32.totalorder %s87, %s89
    %p96 = scmp.eq.s32.totalorder %s16, 1
    %p97 = por %p95, %p96
    %p98 = scmp.ne.s32.totalorder %s89, %s90
    %p99 = scmp.eq.s32.totalorder %s16, 0
    %p100 = por %p98, %p99
    %p101 = scmp.ne.s32.totalorder %s89, %s90
    %p102 = scmp.eq.s32.totalorder %s17, 1
    %p103 = por %p101, %p102
    %p105 = scmp.ne.s32.totalorder %s90, %s104
    %p106 = scmp.eq.s32.totalorder %s17, 0
    %p107 = por %p105, %p106
    %s109 = sadd.s32 %s108, 1
    %p112 = scmp.eq.s32.totalorder %s11, 1
    %p113 = scmp.ne.s32.totalorder %s108, %s110
    %p114 = scmp.eq.s32.totalorder %s11, 0
    %p115 = por %p113, %p114
    %p116 = scmp.ne.s32.totalorder %s108, %s110
    %p117 = scmp.eq.s32.totalorder %s16, 1
    %p118 = por %p116, %p117
    %p119 = scmp.ne.s32.totalorder %s110, %s111
    %p120 = scmp.eq.s32.totalorder %s16, 0
    %p121 = por %p119, %p120
    %p122 = scmp.ne.s32.totalorder %s110, %s111
    %p123 = scmp.eq.s32.totalorder %s17, 1
    %p124 = por %p122, %p123
    %p126 = scmp.ne.s32.totalorder %s111, %s125
    %p127 = scmp.eq.s32.totalorder %s17, 0
    %p128 = por %p126, %p127
    %s129 = ssub.s32 %s11, %s18
    %p130 = scmp.eq.s32.totalorder %s129, 0
    %s132 = sadd.s32 %s131, 1
    %s133 = scalar_select %p130, %s131, %s132
    %p136 = pneg %p130
    %p137 = scmp.eq.s32.totalorder %s11, 1
    %p138 = por %p136, %p137
    %p139 = scmp.ne.s32.totalorder %s131, %s134
    %p140 = scmp.eq.s32.totalorder %s11, 0
    %p141 = por %p139, %p140
    %p142 = scmp.ne.s32.totalorder %s131, %s134
    %p143 = scmp.eq.s32.totalorder %s16, 1
    %p144 = por %p142, %p143
    %p145 = scmp.ne.s32.totalorder %s134, %s135
    %p146 = scmp.eq.s32.totalorder %s16, 0
    %p147 = por %p145, %p146
    %p148 = scmp.ne.s32.totalorder %s134, %s135
    %p149 = scmp.eq.s32.totalorder %s17, 1
    %p150 = por %p148, %p149
    %p152 = scmp.ne.s32.totalorder %s135, %s151
    %p153 = scmp.eq.s32.totalorder %s17, 0
    %p154 = por %p152, %p153
    %p155 = scmp.le.s32.totalorder 1, %s11
    %p156 = scmp.lt.s32.totalorder %s11, 3
    %p157 = pnand %p155, %p156
    %p158 = pneg %p157
    // Predicated region
    $region9: #{nnet_multiclass_forward.1} parent=5 // pred_check
      _
    $region10: #{nnet_multiclass_forward.1} parent=5 // pred_check_branch
      %160 = sbr.rel (%p157) target = $region12
    $region11: #{nnet_multiclass_forward.1} parent=5 // pred_region
      %s161 = ssub.s32 %s11, 1
      // Predicated region
      $region13: #{nnet_multiclass_forward.1} parent=11 // pred_check
        %p162 = pneg %p58
      $region14: #{nnet_multiclass_forward.1} parent=11 // pred_check_branch
        %164 = sbr.rel (%p162) target = $region16
      $region15: #{nnet_multiclass_forward.1} parent=11 // pred_region
        _
      $region16: #{nnet_multiclass_forward.1} parent=11 // pred_fallthru
        _
      // Predicated region
      $region17: #{nnet_multiclass_forward.1} parent=11 // pred_check
        %p165 = pneg %p79
      $region18: #{nnet_multiclass_forward.1} parent=11 // pred_check_branch
        %167 = sbr.rel (%p165) target = $region20
      $region19: #{nnet_multiclass_forward.1} parent=11 // pred_region
        _
      $region20: #{nnet_multiclass_forward.1} parent=11 // pred_fallthru
        _
      // Predicated region
      $region21: #{nnet_multiclass_forward.1} parent=11 // pred_check
        %p168 = pneg %p100
      $region22: #{nnet_multiclass_forward.1} parent=11 // pred_check_branch
        %170 = sbr.rel (%p168) target = $region24
      $region23: #{nnet_multiclass_forward.1} parent=11 // pred_region
        _
      $region24: #{nnet_multiclass_forward.1} parent=11 // pred_fallthru
        _
      // Predicated region
      $region25: #{nnet_multiclass_forward.1} parent=11 // pred_check
        %p171 = pneg %p121
      $region26: #{nnet_multiclass_forward.1} parent=11 // pred_check_branch
        %173 = sbr.rel (%p171) target = $region28
      $region27: #{nnet_multiclass_forward.1} parent=11 // pred_region
        _
      $region28: #{nnet_multiclass_forward.1} parent=11 // pred_fallthru
        _
    $region12: #{nnet_multiclass_forward.1} parent=5 // pred_fallthru
      _
    %p174 = scmp.lt.s32.totalorder %s11, 2
    // Predicated region
    $region29: #{nnet_multiclass_forward.1} parent=5 // pred_check
      %p175 = pneg %p174
    $region30: #{nnet_multiclass_forward.1} parent=5 // pred_check_branch
      %177 = sbr.rel (%p175) target = $region32
    $region31: #{nnet_multiclass_forward.1} parent=5 // pred_region
      // Predicated region
      $region33: #{nnet_multiclass_forward.1} parent=31 // pred_check
        %p178 = pneg %p31
      $region34: #{nnet_multiclass_forward.1} parent=31 // pred_check_branch
        %180 = sbr.rel (%p178) target = $region36
      $region35: #{nnet_multiclass_forward.1} parent=31 // pred_region
        %s181 = smul.u32 16, %s11
        %p182 = scmp.lt.s32.totalorder %s181, 31
        %s183 = scalar_select %p182, %s181, 31
        %s184 = smul.addr %s183, 8
        %s185 = scalar_lea.vmem %s0, %s184
        %s186 = smul.u32 16, %s11
      $region36: #{nnet_multiclass_forward.1} parent=31 // pred_fallthru
        _
    $region32: #{nnet_multiclass_forward.1} parent=5 // pred_fallthru
      _
    %p187 = scmp.le.s32.totalorder 1, %s11
    %p188 = scmp.lt.s32.totalorder %s11, 3
    %p189 = pnand %p187, %p188
    %p190 = pneg %p189
    // Predicated region
    $region37: #{nnet_multiclass_forward.1} parent=5 // pred_check
      _
    $region38: #{nnet_multiclass_forward.1} parent=5 // pred_check_branch
      %192 = sbr.rel (%p189) target = $region40
    $region39: #{nnet_multiclass_forward.1} parent=5 // pred_region
      %s193 = ssub.s32 %s11, 1
      %s194 = smul.u32 16, %s16
      %p195 = scmp.lt.s32.totalorder %s194, 31
      %s196 = scalar_select %p195, %s194, 31
      %s197 = smul.addr %s196, 8
      %s198 = scalar_lea.vmem %s0, %s197
      %p199 = pneg %p37
      %p200 = pneg %p34
      %p201 = pneg %p58
      %p202 = pneg %p55
      %p203 = pneg %p79
      %p204 = pneg %p76
      %p205 = pneg %p100
      %p206 = pneg %p97
      %p207 = pneg %p121
      %p208 = pneg %p118
      %p209 = pneg %p147
      %p210 = pneg %p144
      %s211 = smul.u32 16, %s16
      %p212 = scmp.lt.s32.totalorder %s211, 31
      %s213 = scalar_select %p212, %s211, 31
      %s214 = smul.addr %s213, 8
      %s215 = scalar_lea.vmem %s5, %s214
      %s216 = smul.u32 16, %s16
      %p217 = scmp.lt.s32.totalorder %s216, 31
      %s218 = scalar_select %p217, %s216, 31
      %s219 = smul.addr %s218, 8
      %s220 = scalar_lea.vmem %s0, %s219
      %s221 = smul.u32 16, %s16
      %s222 = smul.u32 16, %s16
      %p223 = scmp.lt.s32.totalorder %s222, 31
      %s224 = scalar_select %p223, %s222, 31
      %s225 = smul.addr %s224, 8
      %s226 = scalar_lea.vmem %s5, %s225
      %s227 = smul.u32 16, %s16
      %v229 = vld [vmem:[%s220] sm:$0xff]
      %v230 = vld [vmem:[%s220 + $0x8] sm:$0xff]
      %v231 = vld [vmem:[%s220 + $0x10] sm:$0xff]
      %v232 = vld [vmem:[%s220 + $0x18] sm:$0xff]
      %v233 = vld [vmem:[%s220 + $0x20] sm:$0xff]
      %v234 = vld [vmem:[%s220 + $0x28] sm:$0xff]
      %v235 = vld [vmem:[%s220 + $0x30] sm:$0xff]
      %v236 = vld [vmem:[%s220 + $0x38] sm:$0xff]
      %v237 = vld [vmem:[%s220 + $0x40] sm:$0xff]
      %v238 = vld [vmem:[%s220 + $0x48] sm:$0xff]
      %v239 = vld [vmem:[%s220 + $0x50] sm:$0xff]
      %v240 = vld [vmem:[%s220 + $0x58] sm:$0xff]
      %v241 = vld [vmem:[%s220 + $0x60] sm:$0xff]
      %v242 = vld [vmem:[%s220 + $0x68] sm:$0xff]
      %v243 = vld [vmem:[%s220 + $0x70] sm:$0xff]
      %v244 = vld [vmem:[%s220 + $0x78] sm:$0xff]
      %v245 = vpack.c.bf16 %v230, %v229
      %v246 = vpack.c.bf16 %v232, %v231
      %v247 = vpack.c.bf16 %v234, %v233
      %v248 = vpack.c.bf16 %v236, %v235
      %v249 = vpack.c.bf16 %v238, %v237
      %v250 = vpack.c.bf16 %v240, %v239
      %v251 = vpack.c.bf16 %v242, %v241
      %v252 = vpack.c.bf16 %v244, %v243
      %v253 = vld [vmem:[%s1] sm:$0xf]
      %v254 = vld [vmem:[%s1 + $0x4] sm:$0xf]
      %v255 = vld [vmem:[%s2] sm:$0x1]
      %v257 = vlaneseq
      %v258 = vshrl.u32 %v257, 7
      %v259 = vsub.s32 0, %v258
      %v260 = vrot.slane %v255, %v259
      %v264 = vunpack.c.l.b16 %v253
      %v265 = vunpack.c.l.b16 %v254
      %v266 = vpack.c.b16 %v265, %v264
      %vm268 = vcmask 130048
      %v270 = vsel %vm268, %v245, 0
      %v273 = vsel %vm268, %v246, 0
      %v276 = vsel %vm268, %v247, 0
      %v279 = vsel %vm268, %v248, 0
      %v282 = vsel %vm268, %v249, 0
      %v285 = vsel %vm268, %v250, 0
      %v288 = vsel %vm268, %v251, 0
      %v291 = vsel %vm268, %v252, 0
      %293 = vmatprep.subr.bf16.mxu0 0
      %294 = vmatpush1.bf16.msra.mxu0 %v266
      %295 = vmatprep.subr.bf16.mxu0 0
      %296 = vmatpush1.bf16.msra.mxu0 0
      %297 = vmatprep.subr.bf16.mxu0 0
      %298 = vmatpush1.bf16.msra.mxu0 0
      %299 = vmatprep.subr.bf16.mxu0 0
      %300 = vmatpush1.bf16.msra.mxu0 0
      %301 = vmatprep.subr.bf16.mxu0 0
      %302 = vmatpush1.bf16.msra.mxu0 0
      %303 = vmatprep.subr.bf16.mxu0 0
      %304 = vmatpush1.bf16.msra.mxu0 0
      %305 = vmatprep.subr.bf16.mxu0 0
      %306 = vmatpush1.bf16.msra.mxu0 0
      %307 = vmatprep.subr.bf16.mxu0 0
      %308 = vmatpush1.bf16.msra.mxu0 0
      %309 = vmatprep.subr.bf16.mxu0 0
      %310 = vmatpush1.bf16.msra.mxu0 0
      %311 = vmatprep.subr.bf16.mxu0 0
      %312 = vmatpush1.bf16.msra.mxu0 0
      %313 = vmatprep.subr.bf16.mxu0 0
      %314 = vmatpush1.bf16.msra.mxu0 0
      %315 = vmatprep.subr.bf16.mxu0 0
      %316 = vmatpush1.bf16.msra.mxu0 0
      %317 = vmatprep.subr.bf16.mxu0 0
      %318 = vmatpush1.bf16.msra.mxu0 0
      %319 = vmatprep.subr.bf16.mxu0 0
      %320 = vmatpush1.bf16.msra.mxu0 0
      %321 = vmatprep.subr.bf16.mxu0 0
      %322 = vmatpush1.bf16.msra.mxu0 0
      %323 = vmatprep.subr.bf16.mxu0 0
      %324 = vmatpush1.bf16.msra.mxu0 0
      %325 = vmatprep.mubr.bf16.mxu0 0
      %326 = vmatmul.mubr.bf16.gmra.mrb[0].mxu0 %v270
      %v327 = vpop.f32.mrb[0].mxu0
      %v328 = vadd.f32 %v260, %v327
      %v329 = vpop.f32.mrb[0].mxu0
      %v330 = vpop.f32.mrb[0].mxu0
      %v331 = vadd.f32 %v260, %v330
      %v332 = vpop.f32.mrb[0].mxu0
      %333 = vmatprep.mubr.bf16.mxu0 0
      %334 = vmatmul.mubr.bf16.gmra.mrb[0].mxu0 %v273
      %v335 = vpop.f32.mrb[0].mxu0
      %v336 = vadd.f32 %v260, %v335
      %v337 = vpop.f32.mrb[0].mxu0
      %v338 = vpop.f32.mrb[0].mxu0
      %v339 = vadd.f32 %v260, %v338
      %v340 = vpop.f32.mrb[0].mxu0
      %341 = vmatprep.mubr.bf16.mxu0 0
      %342 = vmatmul.mubr.bf16.gmra.mrb[0].mxu0 %v276
      %v343 = vpop.f32.mrb[0].mxu0
      %v344 = vadd.f32 %v260, %v343
      %v345 = vpop.f32.mrb[0].mxu0
      %v346 = vpop.f32.mrb[0].mxu0
      %v347 = vadd.f32 %v260, %v346
      %v348 = vpop.f32.mrb[0].mxu0
      %349 = vmatprep.mubr.bf16.mxu0 0
      %350 = vmatmul.mubr.bf16.gmra.mrb[0].mxu0 %v279
      %v351 = vpop.f32.mrb[0].mxu0
      %v352 = vadd.f32 %v260, %v351
      %v353 = vpop.f32.mrb[0].mxu0
      %v354 = vpop.f32.mrb[0].mxu0
      %v355 = vadd.f32 %v260, %v354
      %v356 = vpop.f32.mrb[0].mxu0
      %357 = vmatprep.mubr.bf16.mxu0 0
      %358 = vmatmul.mubr.bf16.gmra.mrb[0].mxu0 %v282
      %v359 = vpop.f32.mrb[0].mxu0
      %v360 = vadd.f32 %v260, %v359
      %v361 = vpop.f32.mrb[0].mxu0
      %v362 = vpop.f32.mrb[0].mxu0
      %v363 = vadd.f32 %v260, %v362
      %v364 = vpop.f32.mrb[0].mxu0
      %365 = vmatprep.mubr.bf16.mxu0 0
      %366 = vmatmul.mubr.bf16.gmra.mrb[0].mxu0 %v285
      %v367 = vpop.f32.mrb[0].mxu0
      %v368 = vadd.f32 %v260, %v367
      %v369 = vpop.f32.mrb[0].mxu0
      %v370 = vpop.f32.mrb[0].mxu0
      %v371 = vadd.f32 %v260, %v370
      %v372 = vpop.f32.mrb[0].mxu0
      %373 = vmatprep.mubr.bf16.mxu0 0
      %374 = vmatmul.mubr.bf16.gmra.mrb[0].mxu0 %v288
      %v375 = vpop.f32.mrb[0].mxu0
      %v376 = vadd.f32 %v260, %v375
      %v377 = vpop.f32.mrb[0].mxu0
      %v378 = vpop.f32.mrb[0].mxu0
      %v379 = vadd.f32 %v260, %v378
      %v380 = vpop.f32.mrb[0].mxu0
      %381 = vmatprep.mubr.bf16.mxu0 0
      %382 = vmatmul.mubr.bf16.gmra.mrb[0].mxu0 %v291
      %v383 = vpop.f32.mrb[0].mxu0
      %v384 = vadd.f32 %v260, %v383
      %v385 = vpop.f32.mrb[0].mxu0
      %v386 = vpop.f32.mrb[0].mxu0
      %v387 = vadd.f32 %v260, %v386
      %v388 = vpop.f32.mrb[0].mxu0
      %389 = vdwg.mxu0
      %v390 = vtanh.pop %v328
      %v391 = vtanh.pop %v331
      %v392 = vtanh.pop %v336
      %v393 = vtanh.pop %v339
      %v394 = vtanh.pop %v344
      %v395 = vtanh.pop %v347
      %v396 = vtanh.pop %v352
      %v397 = vtanh.pop %v355
      %v398 = vtanh.pop %v360
      %v399 = vtanh.pop %v363
      %v400 = vtanh.pop %v368
      %v401 = vtanh.pop %v371
      %v402 = vtanh.pop %v376
      %v403 = vtanh.pop %v379
      %v404 = vtanh.pop %v384
      %v405 = vtanh.pop %v387
      %v406 = vpack.c.bf16 %v391, %v390
      %v407 = vpack.c.bf16 %v393, %v392
      %v408 = vpack.c.bf16 %v395, %v394
      %v409 = vpack.c.bf16 %v397, %v396
      %v410 = vpack.c.bf16 %v399, %v398
      %v411 = vpack.c.bf16 %v401, %v400
      %v412 = vpack.c.bf16 %v403, %v402
      %v413 = vpack.c.bf16 %v405, %v404
      %v414 = vld [vmem:[%s3] sm:$0xf]
      %v415 = vld [vmem:[%s3 + $0x4] sm:$0xf]
      %v416 = vld [vmem:[%s3 + $0x8] sm:$0xf]
      %v417 = vld [vmem:[%s3 + $0xc] sm:$0xf]
      %v418 = vld [vmem:[%s4] sm:$0x1]
      %v420 = vlaneseq
      %v421 = vshrl.u32 %v420, 7
      %v422 = vsub.s32 0, %v421
      %v423 = vrot.slane %v418, %v422
      %v429 = vunpack.c.l.b16 %v414
      %v430 = vunpack.c.l.b16 %v415
      %v431 = vunpack.c.l.b16 %v416
      %v432 = vunpack.c.l.b16 %v417
      %v433 = vpack.c.b16 %v430, %v429
      %v434 = vpack.c.b16 %v432, %v431
      %vm437 = vcmask 261120
      %v439 = vsel %vm437, %v406, 0
      %v442 = vsel %vm437, %v407, 0
      %v445 = vsel %vm437, %v408, 0
      %v448 = vsel %vm437, %v409, 0
      %v451 = vsel %vm437, %v410, 0
      %v454 = vsel %vm437, %v411, 0
      %v457 = vsel %vm437, %v412, 0
      %v460 = vsel %vm437, %v413, 0
      %462 = vmatprep.subr.bf16.mxu0 0
      %463 = vmatpush1.bf16.msra.mxu0 %v433
      %464 = vmatprep.subr.bf16.mxu0 0
      %465 = vmatpush1.bf16.msra.mxu0 %v434
      %466 = vmatprep.subr.bf16.mxu0 0
      %467 = vmatpush1.bf16.msra.mxu0 0
      %468 = vmatprep.subr.bf16.mxu0 0
      %469 = vmatpush1.bf16.msra.mxu0 0
      %470 = vmatprep.subr.bf16.mxu0 0
      %471 = vmatpush1.bf16.msra.mxu0 0
      %472 = vmatprep.subr.bf16.mxu0 0
      %473 = vmatpush1.bf16.msra.mxu0 0
      %474 = vmatprep.subr.bf16.mxu0 0
      %475 = vmatpush1.bf16.msra.mxu0 0
      %476 = vmatprep.subr.bf16.mxu0 0
      %477 = vmatpush1.bf16.msra.mxu0 0
      %478 = vmatprep.subr.bf16.mxu0 0
      %479 = vmatpush1.bf16.msra.mxu0 0
      %480 = vmatprep.subr.bf16.mxu0 0
      %481 = vmatpush1.bf16.msra.mxu0 0
      %482 = vmatprep.subr.bf16.mxu0 0
      %483 = vmatpush1.bf16.msra.mxu0 0
      %484 = vmatprep.subr.bf16.mxu0 0
      %485 = vmatpush1.bf16.msra.mxu0 0
      %486 = vmatprep.subr.bf16.mxu0 0
      %487 = vmatpush1.bf16.msra.mxu0 0
      %488 = vmatprep.subr.bf16.mxu0 0
      %489 = vmatpush1.bf16.msra.mxu0 0
      %490 = vmatprep.subr.bf16.mxu0 0
      %491 = vmatpush1.bf16.msra.mxu0 0
      %492 = vmatprep.subr.bf16.mxu0 0
      %493 = vmatpush1.bf16.msra.mxu0 0
      %494 = vmatprep.mubr.bf16.mxu0 0
      %495 = vmatmul.mubr.bf16.gmra.mrb[0].mxu0 %v439
      %v496 = vpop.f32.mrb[0].mxu0
      %v497 = vadd.f32 %v423, %v496
      %v498 = vpop.f32.mrb[0].mxu0
      %v499 = vpop.f32.mrb[0].mxu0
      %v500 = vadd.f32 %v423, %v499
      %v501 = vpop.f32.mrb[0].mxu0
      %502 = vmatprep.mubr.bf16.mxu0 0
      %503 = vmatmul.mubr.bf16.gmra.mrb[0].mxu0 %v442
      %v504 = vpop.f32.mrb[0].mxu0
      %v505 = vadd.f32 %v423, %v504
      %v506 = vpop.f32.mrb[0].mxu0
      %v507 = vpop.f32.mrb[0].mxu0
      %v508 = vadd.f32 %v423, %v507
      %v509 = vpop.f32.mrb[0].mxu0
      %510 = vmatprep.mubr.bf16.mxu0 0
      %511 = vmatmul.mubr.bf16.gmra.mrb[0].mxu0 %v445
      %v512 = vpop.f32.mrb[0].mxu0
      %v513 = vadd.f32 %v423, %v512
      %v514 = vpop.f32.mrb[0].mxu0
      %v515 = vpop.f32.mrb[0].mxu0
      %v516 = vadd.f32 %v423, %v515
      %v517 = vpop.f32.mrb[0].mxu0
      %518 = vmatprep.mubr.bf16.mxu0 0
      %519 = vmatmul.mubr.bf16.gmra.mrb[0].mxu0 %v448
      %v520 = vpop.f32.mrb[0].mxu0
      %v521 = vadd.f32 %v423, %v520
      %v522 = vpop.f32.mrb[0].mxu0
      %v523 = vpop.f32.mrb[0].mxu0
      %v524 = vadd.f32 %v423, %v523
      %v525 = vpop.f32.mrb[0].mxu0
      %526 = vmatprep.mubr.bf16.mxu0 0
      %527 = vmatmul.mubr.bf16.gmra.mrb[0].mxu0 %v451
      %v528 = vpop.f32.mrb[0].mxu0
      %v529 = vadd.f32 %v423, %v528
      %v530 = vpop.f32.mrb[0].mxu0
      %v531 = vpop.f32.mrb[0].mxu0
      %v532 = vadd.f32 %v423, %v531
      %v533 = vpop.f32.mrb[0].mxu0
      %534 = vmatprep.mubr.bf16.mxu0 0
      %535 = vmatmul.mubr.bf16.gmra.mrb[0].mxu0 %v454
      %v536 = vpop.f32.mrb[0].mxu0
      %v537 = vadd.f32 %v423, %v536
      %v538 = vpop.f32.mrb[0].mxu0
      %v539 = vpop.f32.mrb[0].mxu0
      %v540 = vadd.f32 %v423, %v539
      %v541 = vpop.f32.mrb[0].mxu0
      %542 = vmatprep.mubr.bf16.mxu0 0
      %543 = vmatmul.mubr.bf16.gmra.mrb[0].mxu0 %v457
      %v544 = vpop.f32.mrb[0].mxu0
      %v545 = vadd.f32 %v423, %v544
      %v546 = vpop.f32.mrb[0].mxu0
      %v547 = vpop.f32.mrb[0].mxu0
      %v548 = vadd.f32 %v423, %v547
      %v549 = vpop.f32.mrb[0].mxu0
      %550 = vmatprep.mubr.bf16.mxu0 0
      %551 = vmatmul.mubr.bf16.gmra.mrb[0].mxu0 %v460
      %v552 = vpop.f32.mrb[0].mxu0
      %v553 = vadd.f32 %v423, %v552
      %v554 = vpop.f32.mrb[0].mxu0
      %v555 = vpop.f32.mrb[0].mxu0
      %v556 = vadd.f32 %v423, %v555
      %v557 = vpop.f32.mrb[0].mxu0
      %558 = vdwg.mxu0
      %v559 = vmul.f32 %v497, 0.5
      %v560 = vmul.f32 %v500, 0.5
      %v561 = vmul.f32 %v505, 0.5
      %v562 = vmul.f32 %v508, 0.5
      %v563 = vmul.f32 %v513, 0.5
      %v564 = vmul.f32 %v516, 0.5
      %v565 = vmul.f32 %v521, 0.5
      %v566 = vmul.f32 %v524, 0.5
      %v567 = vmul.f32 %v529, 0.5
      %v568 = vmul.f32 %v532, 0.5
      %v569 = vmul.f32 %v537, 0.5
      %v570 = vmul.f32 %v540, 0.5
      %v571 = vmul.f32 %v545, 0.5
      %v572 = vmul.f32 %v548, 0.5
      %v573 = vmul.f32 %v553, 0.5
      %v574 = vmul.f32 %v556, 0.5
      %v575 = vtanh.pop %v559
      %v576 = vtanh.pop %v560
      %v577 = vtanh.pop %v561
      %v578 = vtanh.pop %v562
      %v579 = vtanh.pop %v563
      %v580 = vtanh.pop %v564
      %v581 = vtanh.pop %v565
      %v582 = vtanh.pop %v566
      %v583 = vtanh.pop %v567
      %v584 = vtanh.pop %v568
      %v585 = vtanh.pop %v569
      %v586 = vtanh.pop %v570
      %v587 = vtanh.pop %v571
      %v588 = vtanh.pop %v572
      %v589 = vtanh.pop %v573
      %v590 = vtanh.pop %v574
      %v591 = vadd.f32 %v575, 1.0
      %v592 = vadd.f32 %v576, 1.0
      %v593 = vadd.f32 %v577, 1.0
      %v594 = vadd.f32 %v578, 1.0
      %v595 = vadd.f32 %v579, 1.0
      %v596 = vadd.f32 %v580, 1.0
      %v597 = vadd.f32 %v581, 1.0
      %v598 = vadd.f32 %v582, 1.0
      %v599 = vadd.f32 %v583, 1.0
      %v600 = vadd.f32 %v584, 1.0
      %v601 = vadd.f32 %v585, 1.0
      %v602 = vadd.f32 %v586, 1.0
      %v603 = vadd.f32 %v587, 1.0
      %v604 = vadd.f32 %v588, 1.0
      %v605 = vadd.f32 %v589, 1.0
      %v606 = vadd.f32 %v590, 1.0
      %v607 = vmul.f32 %v591, 0.5
      %v608 = vmul.f32 %v592, 0.5
      %v609 = vmul.f32 %v593, 0.5
      %v610 = vmul.f32 %v594, 0.5
      %v611 = vmul.f32 %v595, 0.5
      %v612 = vmul.f32 %v596, 0.5
      %v613 = vmul.f32 %v597, 0.5
      %v614 = vmul.f32 %v598, 0.5
      %v615 = vmul.f32 %v599, 0.5
      %v616 = vmul.f32 %v600, 0.5
      %v617 = vmul.f32 %v601, 0.5
      %v618 = vmul.f32 %v602, 0.5
      %v619 = vmul.f32 %v603, 0.5
      %v620 = vmul.f32 %v604, 0.5
      %v621 = vmul.f32 %v605, 0.5
      %v622 = vmul.f32 %v606, 0.5
      %623 = vst [vmem:[%s226] sm:$0xff] %v607
      %624 = vst [vmem:[%s226 + $0x8] sm:$0xff] %v608
      %625 = vst [vmem:[%s226 + $0x10] sm:$0xff] %v609
      %626 = vst [vmem:[%s226 + $0x18] sm:$0xff] %v610
      %627 = vst [vmem:[%s226 + $0x20] sm:$0xff] %v611
      %628 = vst [vmem:[%s226 + $0x28] sm:$0xff] %v612
      %629 = vst [vmem:[%s226 + $0x30] sm:$0xff] %v613
      %630 = vst [vmem:[%s226 + $0x38] sm:$0xff] %v614
      %631 = vst [vmem:[%s226 + $0x40] sm:$0xff] %v615
      %632 = vst [vmem:[%s226 + $0x48] sm:$0xff] %v616
      %633 = vst [vmem:[%s226 + $0x50] sm:$0xff] %v617
      %634 = vst [vmem:[%s226 + $0x58] sm:$0xff] %v618
      %635 = vst [vmem:[%s226 + $0x60] sm:$0xff] %v619
      %636 = vst [vmem:[%s226 + $0x68] sm:$0xff] %v620
      %637 = vst [vmem:[%s226 + $0x70] sm:$0xff] %v621
      %638 = vst [vmem:[%s226 + $0x78] sm:$0xff] %v622
      %s639 = smul.u32 16, %s16
      %p640 = scmp.lt.s32.totalorder %s639, 31
      %s641 = scalar_select %p640, %s639, 31
      %s642 = smul.addr %s641, 8
      %s643 = scalar_lea.vmem %s5, %s642
      // Predicated region
      $region41: #{nnet_multiclass_forward.1} parent=39 // pred_check
        %p644 = pneg %p144
      $region42: #{nnet_multiclass_forward.1} parent=39 // pred_check_branch
        %646 = sbr.rel (%p644) target = $region44
      $region43: #{nnet_multiclass_forward.1} parent=39 // pred_region
        %s647 = smul.u32 16, %s16
      $region44: #{nnet_multiclass_forward.1} parent=39 // pred_fallthru
        _
    $region40: #{nnet_multiclass_forward.1} parent=5 // pred_fallthru
      _
    %p648 = scmp.le.s32.totalorder 2, %s11
    // Predicated region
    $region45: #{nnet_multiclass_forward.1} parent=5 // pred_check
      %p649 = pneg %p648
    $region46: #{nnet_multiclass_forward.1} parent=5 // pred_check_branch
      %651 = sbr.rel (%p649) target = $region48
    $region47: #{nnet_multiclass_forward.1} parent=5 // pred_region
      %s652 = ssub.s32 %s11, 2
      // Predicated region
      $region49: #{nnet_multiclass_forward.1} parent=47 // pred_check
        %p653 = pneg %p150
      $region50: #{nnet_multiclass_forward.1} parent=47 // pred_check_branch
        %655 = sbr.rel (%p653) target = $region52
      $region51: #{nnet_multiclass_forward.1} parent=47 // pred_region
        %s656 = smul.u32 16, %s17
        %p657 = scmp.lt.s32.totalorder %s656, 31
        %s658 = scalar_select %p657, %s656, 31
        %s659 = smul.addr %s658, 8
        %s660 = scalar_lea.vmem %s5, %s659
      $region52: #{nnet_multiclass_forward.1} parent=47 // pred_fallthru
        _
    $region48: #{nnet_multiclass_forward.1} parent=5 // pred_fallthru
      _
  $region6: #{nnet_multiclass_forward.1} parent=0 // loop_footer
    %s15 = sadd.s32 1, %s11
  $region7: #{nnet_multiclass_forward.1} parent=0 // loop_footer_branch
    %10 = sbr.rel target = $region3
  $region8: #{nnet_multiclass_forward.1} parent=0 // loop_exit
    _

</llo_original>
